<compile_context>
chip_gen: v7x
topology: tpu7x:2x2x1
jax: 0.10.0
libtpu: 0.0.40
codegen_flags: <defaults>
</compile_context>

<pallas_src>
import functools

import numpy as np
import jax
import jax.numpy as jnp
from jax.experimental import pallas as pl
from jax.experimental.pallas import tpu as pltpu

NUM_GROUPS = 4
EPS = 1e-5
LANE = 128


def _round_up(v, m):
    return ((v + m - 1) // m) * m


# ----------------------------- kernel helpers -----------------------------

def _silu(v):
    # Exact: v * sigmoid(v) = v * 0.5 * (1 + tanh(v/2)); single EUP op.
    return v * (0.5 * (jnp.tanh(0.5 * v) + 1.0))


def _im2col(h, mask_l, mask_r):
    """Build the fused 3-tap operand for Conv1d(kernel=3, padding=1).

    h: (C, lanes) with C a multiple of 8 (sublane-tile aligned), zero on pad
    lanes.  Rolls go to the XLU; masks reproduce zero padding at per-sample
    boundaries.  Returns (3*C, lanes): [x[l-1] ; x[l] ; x[l+1]].
    """
    lanes = h.shape[1]
    h_m1 = pltpu.roll(h, shift=1, axis=1) * mask_l           # value h[l-1]
    h_p1 = pltpu.roll(h, shift=lanes - 1, axis=1) * mask_r   # value h[l+1]
    return jnp.concatenate([h_m1, h, h_p1], axis=0)


def _gn_affine(h, seg, gmat2, gamma, beta):
    """GroupNorm(NUM_GROUPS) statistics as a fused per-(channel, sample) affine.

    h: (C, lanes); seg: (S, lanes) per-sample lane indicator;
    gmat2: (2C, 2C) block-diagonal group-mean operator; gamma/beta: (C, 1).
    Returns scale, shift of shape (C, S) with  h_norm = h * scale + shift.
    """
    C = h.shape[0]
    hh = jnp.concatenate([h, h * h], axis=0)                         # (2C, lanes)
    # Contract lane axes directly (NT matmul) -> (2C, S) = [sum ; sumsq].
    red = jax.lax.dot_general(hh, seg, (((1,), (1,)), ((), ())),
                              preferred_element_type=jnp.float32)
    stats = jnp.dot(gmat2, red, preferred_element_type=jnp.float32)  # [mean ; E[x^2]]
    mean = stats[:C]
    # TODO(synk): single-pass E[x^2]-mean^2 variance; switch to the centered
    # two-pass form if activations ever have large means vs. spread.
    var = stats[C:] - mean * mean
    scale = gamma * jax.lax.rsqrt(var + EPS)
    shift = beta - mean * scale
    return scale, shift


def _gn_apply(h, scale, shift, seg):
    """Broadcast per-sample scale/shift back to lanes with one stacked matmul."""
    C = h.shape[0]
    ss = jnp.concatenate([scale, shift], axis=0)                     # (2C, S)
    ssb = jnp.dot(ss, seg, preferred_element_type=jnp.float32)       # (2C, lanes)
    return h * ssb[:C] + ssb[C:]


# -------------------------------- kernel ----------------------------------

def residual_block_kernel(x_ref, tp_ref, w_aug_ref, w2_ref, cvec_ref,
                          seg_ref, gmat2_ref, em_ref, out_ref,
                          *, cop, has_res):
    x = x_ref[...]                       # (C_in_p, lanes), zero on pad lanes
    seg = seg_ref[...]                   # (S, lanes)
    gmat2 = gmat2_ref[...]               # (2*C_out_p, 2*C_out_p)
    ml = em_ref[0:1, :]                  # (1, lanes) left-boundary mask
    mr = em_ref[1:2, :]                  # (1, lanes) right-boundary mask

    cvec = cvec_ref[...]                 # packed per-channel constants (C, 8)
    b1 = cvec[:, 0:1]
    br = cvec[:, 1:2]
    g1w = cvec[:, 2:3]
    g1b = cvec[:, 3:4]
    b2 = cvec[:, 4:5]
    g2w = cvec[:, 5:6]
    g2b = cvec[:, 6:7]

    # conv1 (+ folded 1x1 residual conv): ONE stacked MXU matmul.
    im_x = _im2col(x, ml, mr)                                        # (3*C_in_p, lanes)
    hr = jnp.dot(w_aug_ref[...], im_x, preferred_element_type=jnp.float32)
    if has_res:
        h = hr[:cop] + b1
        res = hr[cop:] + br
    else:
        h = hr + b1
        res = x            # nn.Identity residual: x already in VMEM, plain add

    # GroupNorm1 + SiLU
    sc, sh = _gn_affine(h, seg, gmat2, g1w, g1b)
    h = _gn_apply(h, sc, sh, seg)
    h = _silu(h)                         # pad lanes stay exactly zero

    # conv2
    im_h = _im2col(h, ml, mr)
    h = jnp.dot(w2_ref[...], im_h, preferred_element_type=jnp.float32) + b2

    # GroupNorm2 with hoisted time-embedding projection folded into the shift.
    sc, sh = _gn_affine(h, seg, gmat2, g2w, g2b)
    sh = sh + tp_ref[0]                  # (C_out_p, S) per-sample time proj
    h = _gn_apply(h, sc, sh, seg)

    out_ref[...] = _silu(h + res).astype(out_ref.dtype)


# -------------------------------- wrapper ----------------------------------

def _pick_batch_blocks(B, L, max_lanes=4096):
    """Samples-per-block so each block's lane width is a multiple of 128,
    capped (so pipelining survives), preferring >=2 blocks for megacore."""
    cands = []
    for spb in range(1, B + 1):
        if B % spb:
            continue
        lanes = spb * L
        if lanes % LANE == 0 and lanes <= max_lanes:
            cands.append((spb, B // spb, lanes))
    if not cands:
        return B, 1          # single block; lanes padded up to a LANE multiple
    multi = [c for c in cands if c[1] >= 2 and c[2] >= 512]
    spb, nb, _ = max(multi if multi else cands, key=lambda c: c[2])
    return spb, nb


def residual_block_forward(x, t_emb, params):
    B, in_ch, L = x.shape
    out_ch = params["w1"].shape[0]
    cip = _round_up(in_ch, 8)            # sublane-tile aligned channel counts
    cop = _round_up(out_ch, 8)
    has_res = params.get("wr") is not None

    spb, nb = _pick_batch_blocks(B, L)
    lpb = spb * L if nb > 1 else _round_up(B * L, LANE)
    blt = nb * lpb
    bl = B * L

    # ---- layout plumbing (plain JAX, outside the kernel) ----
    # TODO(synk): for production shapes with L % 128 == 0, block directly on
    # (B, C, L) and skip this fold (it costs one extra HBM round trip).
    x_fold = jnp.transpose(x, (1, 0, 2)).reshape(in_ch, bl).astype(jnp.float32)
    x_fold = jnp.pad(x_fold, ((0, cip - in_ch), (0, blt - bl)))

    # Hoisted time-embedding Linear: one batched GEMM in XLA.
    t_proj = (t_emb @ params["tw"].T + params["tb"]).astype(jnp.float32)   # (B, C_out)
    t_proj = jnp.pad(t_proj, ((0, 0), (0, cop - out_ch)))
    tp = t_proj.T.reshape(cop, nb, spb).transpose(1, 0, 2)                 # (nb, cop, spb)

    # Conv weights flattened tap-major for the fused im2col matmul, with
    # channels zero-padded so every tap slab is (8,128)-tile aligned.
    def flat_conv(w, co, ci):
        o, i, _ = w.shape
        wp = jnp.zeros((co, 3, ci), jnp.float32)
        wp = wp.at[:o, :, :i].set(jnp.transpose(w, (0, 2, 1)).astype(jnp.float32))
        return wp.reshape(co, 3 * ci)

    w1f = flat_conv(params["w1"], cop, cip)
    w2f = flat_conv(params["w2"], cop, cop)

    if has_res:
        wr = params["wr"][:, :, 0].astype(jnp.float32)      # (C_out, C_in) 1x1 conv
        wrow = jnp.zeros((cop, 3, cip), jnp.float32)
        wrow = wrow.at[:out_ch, 1, :in_ch].set(wr)          # center tap only
        w_aug = jnp.concatenate([w1f, wrow.reshape(cop, 3 * cip)], axis=0)  # (2*cop, 3*cip)
        br = params["br"]
    else:
        w_aug = w1f                                         # identity residual: no matmul
        br = jnp.zeros((out_ch,), jnp.float32)

    # All (C,1) per-channel constants packed into one (cop, 8) slab.
    def col(v):
        return jnp.pad(v.astype(jnp.float32), (0, cop - out_ch)).reshape(cop, 1)

    cvec = jnp.concatenate([
        col(params["b1"]), col(br),
        col(params["gn1_w"]), col(params["gn1_b"]),
        col(params["b2"]), col(params["gn2_w"]), col(params["gn2_b"]),
        jnp.zeros((cop, 1), jnp.float32)], axis=1)          # (cop, 8)

    # ---- per-block constants (identical for every grid step) ----
    pos = np.arange(lpb)
    valid = pos < spb * L
    in_sample = pos % L
    mask_l = ((in_sample != 0) & valid).astype(np.float32)
    mask_r = ((in_sample != L - 1) & valid).astype(np.float32)
    em = jnp.asarray(np.stack([mask_l, mask_r], axis=0))    # (2, lpb)

    seg_np = np.zeros((spb, lpb), np.float32)               # per-sample lane indicator
    for b in range(spb):
        seg_np[b, b * L:(b + 1) * L] = 1.0
    seg = jnp.asarray(seg_np)

    cpg = out_ch // NUM_GROUPS
    ch = np.arange(cop)
    real = ch < out_ch
    same_group = (ch[:, None] // cpg) == (ch[None, :] // cpg)
    gmat = np.where(same_group & real[:, None] & real[None, :],
                    1.0 / (cpg * L), 0.0).astype(np.float32)
    gmat2_np = np.zeros((2 * cop, 2 * cop), np.float32)     # block-diag [mean | E[x^2]]
    gmat2_np[:cop, :cop] = gmat
    gmat2_np[cop:, cop:] = gmat
    gmat2 = jnp.asarray(gmat2_np)

    def full(arr):
        nd = arr.ndim
        return pl.BlockSpec(arr.shape, lambda i, _nd=nd: (0,) * _nd)

    grid_spec = pltpu.PrefetchScalarGridSpec(
        num_scalar_prefetch=0,
        grid=(nb,),
        in_specs=[
            pl.BlockSpec((cip, lpb), lambda i: (0, i)),        # folded x
            pl.BlockSpec((1, cop, spb), lambda i: (i, 0, 0)),  # time projection
            full(w_aug), full(w2f), full(cvec),
            full(seg), full(gmat2), full(em),
        ],
        out_specs=pl.BlockSpec((cop, lpb), lambda i: (0, i)),
    )

    # Right-sized VMEM request: working set + headroom, never the whole 64 MiB
    # of a v7x core.  (bf16 MXU operands are a further 2x lever at real
    # channel counts on v6e/v7x; kept f32 here for precision.)
    const_bytes = 4 * int(w_aug.size + w2f.size + cvec.size + seg.size
                          + gmat2.size + em.size + cop * spb)
    block_bytes = 4 * lpb * (cip + cop)                  # in / out blocks
    interm_bytes = 4 * lpb * (6 * cop + 3 * cip)         # taps, im2col, h, res
    est = 2 * (block_bytes + const_bytes) + interm_bytes
    vmem_limit = int(min(max(4 * est, 16 * 1024 * 1024), 48 * 1024 * 1024))

    out_fold = pl.pallas_call(
        functools.partial(residual_block_kernel, cop=cop, has_res=has_res),
        out_shape=jax.ShapeDtypeStruct((cop, blt), jnp.float32),
        grid_spec=grid_spec,
        compiler_params=pltpu.CompilerParams(
            dimension_semantics=("parallel",),
            vmem_limit_bytes=vmem_limit),
    )(x_fold, tp, w_aug, w2f, cvec, seg, gmat2, em)

    out = out_fold[:out_ch, :bl].reshape(out_ch, B, L)
    return jnp.transpose(out, (1, 0, 2))


# -------------------------- pure-JAX reference -----------------------------

def reference(x, t_emb, params):
    def conv3(inp, w, b):
        L = inp.shape[-1]
        xp = jnp.pad(inp, ((0, 0), (0, 0), (1, 1)))
        out = jnp.zeros((inp.shape[0], w.shape[0], L), jnp.float32)
        for k in range(3):
            out = out + jnp.einsum('oi,bil->bol', w[:, :, k],
                                   xp[:, :, k:k + L],
                                   precision=jax.lax.Precision.HIGHEST)
        return out + b[None, :, None]

    def gn(h, gamma, beta):
        B, C, L = h.shape
        hg = h.reshape(B, NUM_GROUPS, -1)
        mean = hg.mean(-1, keepdims=True)
        var = ((hg - mean) ** 2).mean(-1, keepdims=True)
        hn = ((hg - mean) / jnp.sqrt(var + EPS)).reshape(B, C, L)
        return hn * gamma[None, :, None] + beta[None, :, None]

    silu = jax.nn.silu
    h = conv3(x, params["w1"], params["b1"])
    h = gn(h, params["gn1_w"], params["gn1_b"])
    h = silu(h)
    h = conv3(h, params["w2"], params["b2"])
    h = gn(h, params["gn2_w"], params["gn2_b"])
    t_proj = t_emb @ params["tw"].T + params["tb"]
    h = h + t_proj[:, :, None]
    res = jnp.einsum('oi,bil->bol', params["wr"][:, :, 0], x,
                     precision=jax.lax.Precision.HIGHEST) \
        + params["br"][None, :, None]
    return silu(h + res)


# ----------------------------------- main -----------------------------------

if __name__ == "__main__":
    B, in_ch, out_ch, L, T = 2, 4, 8, 16, 32   # out_ch divisible by 4 groups

    key = jax.random.PRNGKey(0)
    keys = jax.random.split(key, 14)
    x = jax.random.normal(keys[0], (B, in_ch, L), jnp.float32)
    t_emb = jax.random.normal(keys[1], (B, T), jnp.float32)

    # deterministic synthetic parameters (PyTorch shapes)
    params = dict(
        w1=0.3 * jax.random.normal(keys[2], (out_ch, in_ch, 3), jnp.float32),
        b1=0.1 * jax.random.normal(keys[3], (out_ch,), jnp.float32),
        gn1_w=1.0 + 0.1 * jax.random.normal(keys[4], (out_ch,), jnp.float32),
        gn1_b=0.1 * jax.random.normal(keys[5], (out_ch,), jnp.float32),
        w2=0.3 * jax.random.normal(keys[6], (out_ch, out_ch, 3), jnp.float32),
        b2=0.1 * jax.random.normal(keys[7], (out_ch,), jnp.float32),
        gn2_w=1.0 + 0.1 * jax.random.normal(keys[8], (out_ch,), jnp.float32),
        gn2_b=0.1 * jax.random.normal(keys[9], (out_ch,), jnp.float32),
        tw=0.3 * jax.random.normal(keys[10], (out_ch, T), jnp.float32),
        tb=0.1 * jax.random.normal(keys[11], (out_ch,), jnp.float32),
        wr=0.3 * jax.random.normal(keys[12], (out_ch, in_ch, 1), jnp.float32),
        br=0.1 * jax.random.normal(keys[13], (out_ch,), jnp.float32),
    )

    out = residual_block_forward(x, t_emb, params)
    out = jax.block_until_ready(out)
    assert out.shape == (B, out_ch, L)

    ref = reference(x, t_emb, params)
    np.testing.assert_allclose(np.asarray(out), np.asarray(ref),
                               atol=2e-2, rtol=2e-2)
    print("KERNEL_OK")
</pallas_src>

<mosaic_0001>
module attributes {stable_mosaic.version = 11 : i64} {
  func.func @residual_block_kernel(%arg0: i32, %arg1: memref<8x128xf32, #tpu.memory_space<vmem>>, %arg2: memref<1x8x2xf32, #tpu.memory_space<vmem>>, %arg3: memref<16x24xf32, #tpu.memory_space<vmem>>, %arg4: memref<8x24xf32, #tpu.memory_space<vmem>>, %arg5: memref<8x8xf32, #tpu.memory_space<vmem>>, %arg6: memref<2x128xf32, #tpu.memory_space<vmem>>, %arg7: memref<16x16xf32, #tpu.memory_space<vmem>>, %arg8: memref<2x128xf32, #tpu.memory_space<vmem>>, %arg9: memref<8x128xf32, #tpu.memory_space<vmem>>) attributes {dimension_semantics = [#tpu.dimension_semantics<parallel>], iteration_bounds = array<i64: 1>, scalar_prefetch = 0 : i64, scratch_operands = 0 : i64, tpu.core_type = #tpu.core_type<tc>, window_params = [{transform_indices = @transform_0, window_bounds = array<i64: 8, 128>}, {transform_indices = @transform_1, window_bounds = array<i64: 1, 8, 2>}, {pipeline_mode = #tpu.pipeline_mode<synchronous>, transform_indices = @transform_2, window_bounds = array<i64: 16, 24>}, {pipeline_mode = #tpu.pipeline_mode<synchronous>, transform_indices = @transform_3, window_bounds = array<i64: 8, 24>}, {pipeline_mode = #tpu.pipeline_mode<synchronous>, transform_indices = @transform_4, window_bounds = array<i64: 8, 8>}, {pipeline_mode = #tpu.pipeline_mode<synchronous>, transform_indices = @transform_5, window_bounds = array<i64: 2, 128>}, {pipeline_mode = #tpu.pipeline_mode<synchronous>, transform_indices = @transform_6, window_bounds = array<i64: 16, 16>}, {pipeline_mode = #tpu.pipeline_mode<synchronous>, transform_indices = @transform_7, window_bounds = array<i64: 2, 128>}, {transform_indices = @transform_8, window_bounds = array<i64: 8, 128>}]} {
    %c0 = arith.constant 0 : index
    %c0_0 = arith.constant 0 : index
    %0 = vector.load %arg1[%c0, %c0_0] : memref<8x128xf32, #tpu.memory_space<vmem>>, vector<8x128xf32>
    %c0_1 = arith.constant 0 : index
    %c0_2 = arith.constant 0 : index
    %1 = vector.load %arg6[%c0_1, %c0_2] : memref<2x128xf32, #tpu.memory_space<vmem>>, vector<2x128xf32>
    %c0_3 = arith.constant 0 : index
    %c0_4 = arith.constant 0 : index
    %2 = vector.load %arg7[%c0_3, %c0_4] : memref<16x16xf32, #tpu.memory_space<vmem>>, vector<16x16xf32>
    %c0_5 = arith.constant 0 : index
    %c0_6 = arith.constant 0 : index
    %3 = vector.load %arg8[%c0_5, %c0_6] : memref<2x128xf32, #tpu.memory_space<vmem>>, vector<1x128xf32>
    %c1 = arith.constant 1 : index
    %c0_7 = arith.constant 0 : index
    %4 = vector.load %arg8[%c1, %c0_7] : memref<2x128xf32, #tpu.memory_space<vmem>>, vector<1x128xf32>
    %c0_8 = arith.constant 0 : index
    %c0_9 = arith.constant 0 : index
    %5 = vector.load %arg5[%c0_8, %c0_9] : memref<8x8xf32, #tpu.memory_space<vmem>>, vector<8x8xf32>
    %6 = vector.extract_strided_slice %5 {offsets = [0, 0], sizes = [8, 1], strides = [1, 1]} : vector<8x8xf32> to vector<8x1xf32>
    %7 = vector.extract_strided_slice %5 {offsets = [0, 1], sizes = [8, 1], strides = [1, 1]} : vector<8x8xf32> to vector<8x1xf32>
    %8 = vector.extract_strided_slice %5 {offsets = [0, 2], sizes = [8, 1], strides = [1, 1]} : vector<8x8xf32> to vector<8x1xf32>
    %9 = vector.extract_strided_slice %5 {offsets = [0, 3], sizes = [8, 1], strides = [1, 1]} : vector<8x8xf32> to vector<8x1xf32>
    %10 = vector.extract_strided_slice %5 {offsets = [0, 4], sizes = [8, 1], strides = [1, 1]} : vector<8x8xf32> to vector<8x1xf32>
    %11 = vector.extract_strided_slice %5 {offsets = [0, 5], sizes = [8, 1], strides = [1, 1]} : vector<8x8xf32> to vector<8x1xf32>
    %12 = vector.extract_strided_slice %5 {offsets = [0, 6], sizes = [8, 1], strides = [1, 1]} : vector<8x8xf32> to vector<8x1xf32>
    %c1_i32 = arith.constant 1 : i32
    %13 = tpu.dynamic_rotate %0 by %c1_i32 dim 1 : vector<8x128xf32>, i32 -> vector<8x128xf32>
    %14 = vector.broadcast %3 : vector<1x128xf32> to vector<8x128xf32>
    %15 = arith.mulf %13, %14 : vector<8x128xf32>
    %c127_i32 = arith.constant 127 : i32
    %16 = tpu.dynamic_rotate %0 by %c127_i32 dim 1 : vector<8x128xf32>, i32 -> vector<8x128xf32>
    %17 = vector.broadcast %4 : vector<1x128xf32> to vector<8x128xf32>
    %18 = arith.mulf %16, %17 : vector<8x128xf32>
    %19 = tpu.concatenate %15, %0, %18 in 0 : vector<8x128xf32>, vector<8x128xf32>, vector<8x128xf32> -> vector<24x128xf32>
    %c0_10 = arith.constant 0 : index
    %c0_11 = arith.constant 0 : index
    %20 = vector.load %arg3[%c0_10, %c0_11] : memref<16x24xf32, #tpu.memory_space<vmem>>, vector<16x24xf32>
    %cst = arith.constant dense<0.000000e+00> : vector<16x128xf32>
    %21 = tpu.matmul %20, %19, %cst {dimension_numbers = #tpu.dot_dimension_numbers<[1], [0], [0], [1], [0, 0, 1, 1], [], []>} : vector<16x24xf32>, vector<24x128xf32>, vector<16x128xf32> -> vector<16x128xf32>
    %22 = vector.extract_strided_slice %21 {offsets = [0, 0], sizes = [8, 128], strides = [1, 1]} : vector<16x128xf32> to vector<8x128xf32>
    %23 = vector.broadcast %6 : vector<8x1xf32> to vector<8x128xf32>
    %24 = arith.addf %22, %23 : vector<8x128xf32>
    %25 = vector.extract_strided_slice %21 {offsets = [8, 0], sizes = [8, 128], strides = [1, 1]} : vector<16x128xf32> to vector<8x128xf32>
    %26 = vector.broadcast %7 : vector<8x1xf32> to vector<8x128xf32>
    %27 = arith.addf %25, %26 : vector<8x128xf32>
    %28 = arith.mulf %24, %24 : vector<8x128xf32>
    %29 = tpu.concatenate %24, %28 in 0 : vector<8x128xf32>, vector<8x128xf32> -> vector<16x128xf32>
    %cst_12 = arith.constant dense<0.000000e+00> : vector<16x2xf32>
    %30 = tpu.matmul %29, %1, %cst_12 {dimension_numbers = #tpu.dot_dimension_numbers<[1], [1], [0], [0], [0, 0, 1, 0], [], []>} : vector<16x128xf32>, vector<2x128xf32>, vector<16x2xf32> -> vector<16x2xf32>
    %cst_13 = arith.constant dense<0.000000e+00> : vector<16x2xf32>
    %31 = tpu.matmul %2, %30, %cst_13 {dimension_numbers = #tpu.dot_dimension_numbers<[1], [0], [0], [1], [0, 0, 1, 1], [], []>} : vector<16x16xf32>, vector<16x2xf32>, vector<16x2xf32> -> vector<16x2xf32>
    %32 = vector.extract_strided_slice %31 {offsets = [0, 0], sizes = [8, 2], strides = [1, 1]} : vector<16x2xf32> to vector<8x2xf32>
    %33 = vector.extract_strided_slice %31 {offsets = [8, 0], sizes = [8, 2], strides = [1, 1]} : vector<16x2xf32> to vector<8x2xf32>
    %34 = arith.mulf %32, %32 : vector<8x2xf32>
    %35 = arith.subf %33, %34 : vector<8x2xf32>
    %cst_14 = arith.constant 9.99999974E-6 : f32
    %36 = vector.broadcast %cst_14 : f32 to vector<8x2xf32>
    %37 = arith.addf %35, %36 : vector<8x2xf32>
    %38 = math.rsqrt %37 : vector<8x2xf32>
    %39 = vector.broadcast %8 : vector<8x1xf32> to vector<8x2xf32>
    %40 = arith.mulf %39, %38 : vector<8x2xf32>
    %41 = arith.mulf %32, %40 : vector<8x2xf32>
    %42 = vector.broadcast %9 : vector<8x1xf32> to vector<8x2xf32>
    %43 = arith.subf %42, %41 : vector<8x2xf32>
    %44 = tpu.concatenate %40, %43 in 0 : vector<8x2xf32>, vector<8x2xf32> -> vector<16x2xf32>
    %cst_15 = arith.constant dense<0.000000e+00> : vector<16x128xf32>
    %45 = tpu.matmul %44, %1, %cst_15 {dimension_numbers = #tpu.dot_dimension_numbers<[1], [0], [0], [1], [0, 0, 1, 1], [], []>} : vector<16x2xf32>, vector<2x128xf32>, vector<16x128xf32> -> vector<16x128xf32>
    %46 = vector.extract_strided_slice %45 {offsets = [0, 0], sizes = [8, 128], strides = [1, 1]} : vector<16x128xf32> to vector<8x128xf32>
    %47 = arith.mulf %24, %46 : vector<8x128xf32>
    %48 = vector.extract_strided_slice %45 {offsets = [8, 0], sizes = [8, 128], strides = [1, 1]} : vector<16x128xf32> to vector<8x128xf32>
    %49 = arith.addf %47, %48 : vector<8x128xf32>
    %cst_16 = arith.constant 5.000000e-01 : f32
    %50 = vector.broadcast %cst_16 : f32 to vector<8x128xf32>
    %51 = arith.mulf %50, %49 : vector<8x128xf32>
    %52 = math.tanh %51 : vector<8x128xf32>
    %cst_17 = arith.constant 1.000000e+00 : f32
    %53 = vector.broadcast %cst_17 : f32 to vector<8x128xf32>
    %54 = arith.addf %52, %53 : vector<8x128xf32>
    %cst_18 = arith.constant 5.000000e-01 : f32
    %55 = vector.broadcast %cst_18 : f32 to vector<8x128xf32>
    %56 = arith.mulf %55, %54 : vector<8x128xf32>
    %57 = arith.mulf %49, %56 : vector<8x128xf32>
    %c1_i32_19 = arith.constant 1 : i32
    %58 = tpu.dynamic_rotate %57 by %c1_i32_19 dim 1 : vector<8x128xf32>, i32 -> vector<8x128xf32>
    %59 = vector.broadcast %3 : vector<1x128xf32> to vector<8x128xf32>
    %60 = arith.mulf %58, %59 : vector<8x128xf32>
    %c127_i32_20 = arith.constant 127 : i32
    %61 = tpu.dynamic_rotate %57 by %c127_i32_20 dim 1 : vector<8x128xf32>, i32 -> vector<8x128xf32>
    %62 = vector.broadcast %4 : vector<1x128xf32> to vector<8x128xf32>
    %63 = arith.mulf %61, %62 : vector<8x128xf32>
    %64 = tpu.concatenate %60, %57, %63 in 0 : vector<8x128xf32>, vector<8x128xf32>, vector<8x128xf32> -> vector<24x128xf32>
    %c0_21 = arith.constant 0 : index
    %c0_22 = arith.constant 0 : index
    %65 = vector.load %arg4[%c0_21, %c0_22] : memref<8x24xf32, #tpu.memory_space<vmem>>, vector<8x24xf32>
    %cst_23 = arith.constant dense<0.000000e+00> : vector<8x128xf32>
    %66 = tpu.matmul %65, %64, %cst_23 {dimension_numbers = #tpu.dot_dimension_numbers<[1], [0], [0], [1], [0, 0, 1, 1], [], []>} : vector<8x24xf32>, vector<24x128xf32>, vector<8x128xf32> -> vector<8x128xf32>
    %67 = vector.broadcast %10 : vector<8x1xf32> to vector<8x128xf32>
    %68 = arith.addf %66, %67 : vector<8x128xf32>
    %69 = arith.mulf %68, %68 : vector<8x128xf32>
    %70 = tpu.concatenate %68, %69 in 0 : vector<8x128xf32>, vector<8x128xf32> -> vector<16x128xf32>
    %cst_24 = arith.constant dense<0.000000e+00> : vector<16x2xf32>
    %71 = tpu.matmul %70, %1, %cst_24 {dimension_numbers = #tpu.dot_dimension_numbers<[1], [1], [0], [0], [0, 0, 1, 0], [], []>} : vector<16x128xf32>, vector<2x128xf32>, vector<16x2xf32> -> vector<16x2xf32>
    %cst_25 = arith.constant dense<0.000000e+00> : vector<16x2xf32>
    %72 = tpu.matmul %2, %71, %cst_25 {dimension_numbers = #tpu.dot_dimension_numbers<[1], [0], [0], [1], [0, 0, 1, 1], [], []>} : vector<16x16xf32>, vector<16x2xf32>, vector<16x2xf32> -> vector<16x2xf32>
    %73 = vector.extract_strided_slice %72 {offsets = [0, 0], sizes = [8, 2], strides = [1, 1]} : vector<16x2xf32> to vector<8x2xf32>
    %74 = vector.extract_strided_slice %72 {offsets = [8, 0], sizes = [8, 2], strides = [1, 1]} : vector<16x2xf32> to vector<8x2xf32>
    %75 = arith.mulf %73, %73 : vector<8x2xf32>
    %76 = arith.subf %74, %75 : vector<8x2xf32>
    %cst_26 = arith.constant 9.99999974E-6 : f32
    %77 = vector.broadcast %cst_26 : f32 to vector<8x2xf32>
    %78 = arith.addf %76, %77 : vector<8x2xf32>
    %79 = math.rsqrt %78 : vector<8x2xf32>
    %80 = vector.broadcast %11 : vector<8x1xf32> to vector<8x2xf32>
    %81 = arith.mulf %80, %79 : vector<8x2xf32>
    %82 = arith.mulf %73, %81 : vector<8x2xf32>
    %83 = vector.broadcast %12 : vector<8x1xf32> to vector<8x2xf32>
    %84 = arith.subf %83, %82 : vector<8x2xf32>
    %c0_27 = arith.constant 0 : index
    %c0_28 = arith.constant 0 : index
    %c0_29 = arith.constant 0 : index
    %85 = vector.load %arg2[%c0_27, %c0_28, %c0_29] : memref<1x8x2xf32, #tpu.memory_space<vmem>>, vector<1x8x2xf32>
    %86 = vector.shape_cast %85 : vector<1x8x2xf32> to vector<8x2xf32>
    %87 = arith.addf %84, %86 : vector<8x2xf32>
    %88 = tpu.concatenate %81, %87 in 0 : vector<8x2xf32>, vector<8x2xf32> -> vector<16x2xf32>
    %cst_30 = arith.constant dense<0.000000e+00> : vector<16x128xf32>
    %89 = tpu.matmul %88, %1, %cst_30 {dimension_numbers = #tpu.dot_dimension_numbers<[1], [0], [0], [1], [0, 0, 1, 1], [], []>} : vector<16x2xf32>, vector<2x128xf32>, vector<16x128xf32> -> vector<16x128xf32>
    %90 = vector.extract_strided_slice %89 {offsets = [0, 0], sizes = [8, 128], strides = [1, 1]} : vector<16x128xf32> to vector<8x128xf32>
    %91 = arith.mulf %68, %90 : vector<8x128xf32>
    %92 = vector.extract_strided_slice %89 {offsets = [8, 0], sizes = [8, 128], strides = [1, 1]} : vector<16x128xf32> to vector<8x128xf32>
    %93 = arith.addf %91, %92 : vector<8x128xf32>
    %94 = arith.addf %93, %27 : vector<8x128xf32>
    %cst_31 = arith.constant 5.000000e-01 : f32
    %95 = vector.broadcast %cst_31 : f32 to vector<8x128xf32>
    %96 = arith.mulf %95, %94 : vector<8x128xf32>
    %97 = math.tanh %96 : vector<8x128xf32>
    %cst_32 = arith.constant 1.000000e+00 : f32
    %98 = vector.broadcast %cst_32 : f32 to vector<8x128xf32>
    %99 = arith.addf %97, %98 : vector<8x128xf32>
    %cst_33 = arith.constant 5.000000e-01 : f32
    %100 = vector.broadcast %cst_33 : f32 to vector<8x128xf32>
    %101 = arith.mulf %100, %99 : vector<8x128xf32>
    %102 = arith.mulf %94, %101 : vector<8x128xf32>
    %c0_34 = arith.constant 0 : index
    %c0_35 = arith.constant 0 : index
    %103 = vector.load %arg9[%c0_34, %c0_35] : memref<8x128xf32, #tpu.memory_space<vmem>>, vector<8x128xf32>
    tpu.vector_store %arg9[%c0_34, %c0_35], %102 {strides = array<i32>} : memref<8x128xf32, #tpu.memory_space<vmem>>, vector<8x128xf32>,
    return
  }
  func.func @transform_0(%arg0: i32) -> (i32, i32) {
    %c0_i32 = arith.constant 0 : i32
    %c0_i32_0 = arith.constant 0 : i32
    return %c0_i32, %arg0 : i32, i32
  }
  func.func @transform_1(%arg0: i32) -> (i32, i32, i32) {
    %c0_i32 = arith.constant 0 : i32
    %c0_i32_0 = arith.constant 0 : i32
    %c0_i32_1 = arith.constant 0 : i32
    return %arg0, %c0_i32, %c0_i32_0 : i32, i32, i32
  }
  func.func @transform_2(%arg0: i32) -> (i32, i32) {
    %c0_i32 = arith.constant 0 : i32
    %c0_i32_0 = arith.constant 0 : i32
    %c0_i32_1 = arith.constant 0 : i32
    return %c0_i32, %c0_i32_0 : i32, i32
  }
  func.func @transform_3(%arg0: i32) -> (i32, i32) {
    %c0_i32 = arith.constant 0 : i32
    %c0_i32_0 = arith.constant 0 : i32
    %c0_i32_1 = arith.constant 0 : i32
    return %c0_i32, %c0_i32_0 : i32, i32
  }
  func.func @transform_4(%arg0: i32) -> (i32, i32) {
    %c0_i32 = arith.constant 0 : i32
    %c0_i32_0 = arith.constant 0 : i32
    %c0_i32_1 = arith.constant 0 : i32
    return %c0_i32, %c0_i32_0 : i32, i32
  }
  func.func @transform_5(%arg0: i32) -> (i32, i32) {
    %c0_i32 = arith.constant 0 : i32
    %c0_i32_0 = arith.constant 0 : i32
    %c0_i32_1 = arith.constant 0 : i32
    return %c0_i32, %c0_i32_0 : i32, i32
  }
  func.func @transform_6(%arg0: i32) -> (i32, i32) {
    %c0_i32 = arith.constant 0 : i32
    %c0_i32_0 = arith.constant 0 : i32
    %c0_i32_1 = arith.constant 0 : i32
    return %c0_i32, %c0_i32_0 : i32, i32
  }
  func.func @transform_7(%arg0: i32) -> (i32, i32) {
    %c0_i32 = arith.constant 0 : i32
    %c0_i32_0 = arith.constant 0 : i32
    %c0_i32_1 = arith.constant 0 : i32
    return %c0_i32, %c0_i32_0 : i32, i32
  }
  func.func @transform_8(%arg0: i32) -> (i32, i32) {
    %c0_i32 = arith.constant 0 : i32
    %c0_i32_0 = arith.constant 0 : i32
    return %c0_i32, %arg0 : i32, i32
  }
}

</mosaic_0001>

<llo_original>
// kernel: tpu_custom_call.1
$region0: #{tpu_custom_call.1}
  #allocation0 [shape = 'u32[]', space=smem, size = 0x4, offset = 0x4, fixed_abs, tag = 'smem constant byte address 0x4 - core index']
  #allocation1 [shape = 'u32[144,128]{1,0:T(1,128)}', space=vmem, size = 0x12000, scoped, tag = 'internal scratch']
  %s0 = inlined_call_operand.hbm [shape: f32[8,128], index: 0, kind: input, shape index: {}]
  %s1 = inlined_call_operand.vmem [shape: f32[1,8,2], index: 1, kind: input, shape index: {}]
  %s2 = inlined_call_operand.vmem [shape: f32[16,24], index: 2, kind: input, shape index: {}]
  %s3 = inlined_call_operand.hbm [shape: f32[8,24], index: 3, kind: input, shape index: {}]
  %s4 = inlined_call_operand.hbm [shape: f32[8,8], index: 4, kind: input, shape index: {}]
  %s5 = inlined_call_operand.hbm [shape: f32[2,128], index: 5, kind: input, shape index: {}]
  %s6 = inlined_call_operand.vmem [shape: f32[16,16], index: 6, kind: input, shape index: {}]
  %s7 = inlined_call_operand.vmem [shape: f32[2,128], index: 7, kind: input, shape index: {}]
  %s8 = inlined_call_operand.hbm [shape: f32[8,128], index: 8, kind: output, shape index: {}]
  %s9 = sld [smem:[#allocation0]]
  $region58: #{tpu_custom_call.1} parent=0
    _
  %s11 = ssub.s32 1, %s9
  %s12 = scalar_select 0, %s11, %s9
  $region1: #{tpu_custom_call.1} parent=0
    #allocation2 [shape = 'u8[4096]{0}', space=vmem, size = 0x1000, scoped, tag = 'input window, operand 0, single buffered']
    #allocation3 [shape = 's32[1]{0}', space=sflag, size = 0x4, scoped, tag = 'scoped memory for tpu_custom_call.1']
    #allocation4 [shape = 's32[1]{0}', space=sflag, size = 0x4, scoped, tag = 'scoped memory for tpu_custom_call.1']
    #allocation5 [shape = 'u8[4096]{0}', space=vmem, size = 0x1000, scoped, tag = 'input window, operand 3, single buffered']
    #allocation6 [shape = 's32[1]{0}', space=sflag, size = 0x4, scoped, tag = 'scoped memory for tpu_custom_call.1']
    #allocation7 [shape = 'u8[4096]{0}', space=vmem, size = 0x1000, scoped, tag = 'input window, operand 4, single buffered']
    #allocation8 [shape = 'u8[1024]{0}', space=vmem, size = 0x400, scoped, tag = 'input window, operand 5, single buffered']
    #allocation9 [shape = 's32[1]{0}', space=sflag, size = 0x4, scoped, tag = 'scoped memory for tpu_custom_call.1']
    #allocation10 [shape = 'u8[4096]{0}', space=vmem, size = 0x1000, scoped, tag = 'output window, operand 0, single buffered']
    %13 = vsyncpa [#allocation3], 0
    %14 = vsyncpa [#allocation6], 0
    %15 = vsyncpa [#allocation9], 0
    %16 = vsyncpa [#allocation4], 0
    // Predicated region
    $region2: #{tpu_custom_call.1} parent=1 // pred_check
      _
    $region3: #{tpu_custom_call.1} parent=1 // pred_check_branch
      %18 = sbr.rel (0) target = $region5
    $region4: #{tpu_custom_call.1} parent=1 // pred_region
      %s20 = ssub.s32 128, 128
      %21 = vsyncadd [#allocation3], %s20
      %s23 = sshll.u32 [#allocation2], 4
      %s24 = int_to_ptr.vmem [resolvable:$true] %s23
      %26 = dma.hbm_to_vmem [thread:$0]  %s0, 128, %s24, [#allocation3]
    $region5: #{tpu_custom_call.1} parent=1 // pred_fallthru
      _
    // Predicated region
    $region6: #{tpu_custom_call.1} parent=1 // pred_check
      _
    $region7: #{tpu_custom_call.1} parent=1 // pred_check_branch
      %28 = sbr.rel (0) target = $region9
    $region8: #{tpu_custom_call.1} parent=1 // pred_region
      _
    $region9: #{tpu_custom_call.1} parent=1 // pred_fallthru
      _
    // Predicated region
    $region10: #{tpu_custom_call.1} parent=1 // pred_check
      _
    $region11: #{tpu_custom_call.1} parent=1 // pred_check_branch
      %30 = sbr.rel (0) target = $region13
    $region12: #{tpu_custom_call.1} parent=1 // pred_region
      _
    $region13: #{tpu_custom_call.1} parent=1 // pred_fallthru
      _
    // Predicated region
    $region14: #{tpu_custom_call.1} parent=1 // pred_check
      _
    $region15: #{tpu_custom_call.1} parent=1 // pred_check_branch
      %32 = sbr.rel (0) target = $region17
    $region16: #{tpu_custom_call.1} parent=1 // pred_region
      %s34 = ssub.s32 128, 128
      %35 = vsyncadd [#allocation6], %s34
      %s37 = sshll.u32 [#allocation5], 4
      %s38 = int_to_ptr.vmem [resolvable:$true] %s37
      %40 = dma.hbm_to_vmem [thread:$0]  %s3, 128, %s38, [#allocation6]
    $region17: #{tpu_custom_call.1} parent=1 // pred_fallthru
      _
    // Predicated region
    $region18: #{tpu_custom_call.1} parent=1 // pred_check
      _
    $region19: #{tpu_custom_call.1} parent=1 // pred_check_branch
      %42 = sbr.rel (0) target = $region21
    $region20: #{tpu_custom_call.1} parent=1 // pred_region
      %s44 = ssub.s32 128, 128
      %45 = vsyncadd [#allocation6], %s44
      %s47 = sshll.u32 [#allocation7], 4
      %s48 = int_to_ptr.vmem [resolvable:$true] %s47
      %50 = dma.hbm_to_vmem [thread:$0]  %s4, 128, %s48, [#allocation6]
    $region21: #{tpu_custom_call.1} parent=1 // pred_fallthru
      _
    // Predicated region
    $region22: #{tpu_custom_call.1} parent=1 // pred_check
      _
    $region23: #{tpu_custom_call.1} parent=1 // pred_check_branch
      %52 = sbr.rel (0) target = $region25
    $region24: #{tpu_custom_call.1} parent=1 // pred_region
      %s54 = ssub.s32 32, 32
      %55 = vsyncadd [#allocation9], %s54
      %s57 = sshll.u32 [#allocation8], 4
      %s58 = int_to_ptr.vmem [resolvable:$true] %s57
      %60 = dma.hbm_to_vmem [thread:$0]  %s5, 32, %s58, [#allocation9]
    $region25: #{tpu_custom_call.1} parent=1 // pred_fallthru
      _
    // Predicated region
    $region26: #{tpu_custom_call.1} parent=1 // pred_check
      _
    $region27: #{tpu_custom_call.1} parent=1 // pred_check_branch
      %62 = sbr.rel (0) target = $region29
    $region28: #{tpu_custom_call.1} parent=1 // pred_region
      _
    $region29: #{tpu_custom_call.1} parent=1 // pred_fallthru
      _
    // Predicated region
    $region30: #{tpu_custom_call.1} parent=1 // pred_check
      _
    $region31: #{tpu_custom_call.1} parent=1 // pred_check_branch
      %64 = sbr.rel (0) target = $region33
    $region32: #{tpu_custom_call.1} parent=1 // pred_region
      _
    $region33: #{tpu_custom_call.1} parent=1 // pred_fallthru
      _
    // Predicated region
    $region34: #{tpu_custom_call.1} parent=1 // pred_check
      _
    $region35: #{tpu_custom_call.1} parent=1 // pred_check_branch
      %66 = sbr.rel (0) target = $region37
    $region36: #{tpu_custom_call.1} parent=1 // pred_region
      %67 = dma.done [#allocation3], 128
    $region37: #{tpu_custom_call.1} parent=1 // pred_fallthru
      _
    // Predicated region
    $region38: #{tpu_custom_call.1} parent=1 // pred_check
      _
    $region39: #{tpu_custom_call.1} parent=1 // pred_check_branch
      %69 = sbr.rel (0) target = $region41
    $region40: #{tpu_custom_call.1} parent=1 // pred_region
      %70 = dma.done [#allocation6], 128
    $region41: #{tpu_custom_call.1} parent=1 // pred_fallthru
      _
    // Predicated region
    $region42: #{tpu_custom_call.1} parent=1 // pred_check
      _
    $region43: #{tpu_custom_call.1} parent=1 // pred_check_branch
      %72 = sbr.rel (0) target = $region45
    $region44: #{tpu_custom_call.1} parent=1 // pred_region
      %73 = dma.done [#allocation6], 128
    $region45: #{tpu_custom_call.1} parent=1 // pred_fallthru
      _
    // Predicated region
    $region46: #{tpu_custom_call.1} parent=1 // pred_check
      _
    $region47: #{tpu_custom_call.1} parent=1 // pred_check_branch
      %75 = sbr.rel (0) target = $region49
    $region48: #{tpu_custom_call.1} parent=1 // pred_region
      %76 = dma.done [#allocation9], 32
    $region49: #{tpu_custom_call.1} parent=1 // pred_fallthru
      _
    %v77 = vld [vmem:[#allocation2] sm:$0xff]
    %v78 = vld [vmem:[#allocation8] sm:$0x3]
    %v79 = vld [vmem:[%s6] sm:$0xff]
    %v80 = vld [vmem:[%s6 + $0x8] sm:$0xff]
    %v81 = vld [vmem:[%s7] sm:$0x1]
    %v82 = vld [vmem:[%s7 + $0x1] sm:$0x1]
    %v83 = vld [vmem:[#allocation7] sm:$0xff]
    %84 = vrot.lane.b32.xlu0 %v77, 1
    %v85 = vpop.permute.xlu0 %84
    %v86 = vlaneseq
    %v87 = vshrl.u32 %v86, 7
    %v88 = vsub.s32 0, %v87
    %v89 = vrot.slane %v81, %v88
    %v90 = vmul.f32 %v85, %v89
    %91 = vrot.lane.b32.xlu0 %v77, 127
    %v92 = vpop.permute.xlu0 %91
    %v93 = vlaneseq
    %v94 = vshrl.u32 %v93, 7
    %v95 = vsub.s32 0, %v94
    %v96 = vrot.slane %v82, %v95
    %v97 = vmul.f32 %v92, %v96
    %v98 = vld [vmem:[%s2] sm:$0xff]
    %v99 = vld [vmem:[%s2 + $0x8] sm:$0xff]
    %vm100 = vcmask 195584
    %v102 = vsel %vm100, %v98, 0
    %v105 = vsel %vm100, %v99, 0
    %107 = vmatprep.subr.mxu0 0.0
    %108 = vmatpush1.msra.mxu0 %v90
    %109 = vmatprep.subr.mxu0 0.0
    %110 = vmatpush1.msra.mxu0 %v77
    %111 = vmatprep.subr.mxu0 0.0
    %112 = vmatpush1.msra.mxu0 %v97
    %113 = vmatprep.subr.mxu0 0.0
    %114 = vmatpush1.msra.mxu0 0.0
    %115 = vmatprep.subr.mxu0 0.0
    %116 = vmatpush1.msra.mxu0 0.0
    %117 = vmatprep.subr.mxu0 0.0
    %118 = vmatpush1.msra.mxu0 0.0
    %119 = vmatprep.subr.mxu0 0.0
    %120 = vmatpush1.msra.mxu0 0.0
    %121 = vmatprep.subr.mxu0 0.0
    %122 = vmatpush1.msra.mxu0 0.0
    %123 = vmatprep.subr.mxu0 0.0
    %124 = vmatpush1.msra.mxu0 0.0
    %125 = vmatprep.subr.mxu0 0.0
    %126 = vmatpush1.msra.mxu0 0.0
    %127 = vmatprep.subr.mxu0 0.0
    %128 = vmatpush1.msra.mxu0 0.0
    %129 = vmatprep.subr.mxu0 0.0
    %130 = vmatpush1.msra.mxu0 0.0
    %131 = vmatprep.subr.mxu0 0.0
    %132 = vmatpush1.msra.mxu0 0.0
    %133 = vmatprep.subr.mxu0 0.0
    %134 = vmatpush1.msra.mxu0 0.0
    %135 = vmatprep.subr.mxu0 0.0
    %136 = vmatpush1.msra.mxu0 0.0
    %137 = vmatprep.subr.mxu0 0.0
    %138 = vmatpush1.msra.mxu0 0.0
    %139 = vmatprep.subr.mxu0 0.0
    %140 = vmatpush1.msra.mxu0 0.0
    %141 = vmatprep.subr.mxu0 0.0
    %142 = vmatpush1.msra.mxu0 0.0
    %143 = vmatprep.subr.mxu0 0.0
    %144 = vmatpush1.msra.mxu0 0.0
    %145 = vmatprep.subr.mxu0 0.0
    %146 = vmatpush1.msra.mxu0 0.0
    %147 = vmatprep.subr.mxu0 0.0
    %148 = vmatpush1.msra.mxu0 0.0
    %149 = vmatprep.subr.mxu0 0.0
    %150 = vmatpush1.msra.mxu0 0.0
    %151 = vmatprep.subr.mxu0 0.0
    %152 = vmatpush1.msra.mxu0 0.0
    %153 = vmatprep.subr.mxu0 0.0
    %154 = vmatpush1.msra.mxu0 0.0
    %155 = vmatprep.subr.mxu0 0.0
    %156 = vmatpush1.msra.mxu0 0.0
    %157 = vmatprep.subr.mxu0 0.0
    %158 = vmatpush1.msra.mxu0 0.0
    %159 = vmatprep.subr.mxu0 0.0
    %160 = vmatpush1.msra.mxu0 0.0
    %161 = vmatprep.subr.mxu0 0.0
    %162 = vmatpush1.msra.mxu0 0.0
    %163 = vmatprep.subr.mxu0 0.0
    %164 = vmatpush1.msra.mxu0 0.0
    %165 = vmatprep.subr.mxu0 0.0
    %166 = vmatpush1.msra.mxu0 0.0
    %167 = vmatprep.subr.mxu0 0.0
    %168 = vmatpush1.msra.mxu0 0.0
    %169 = vmatprep.subr.mxu0 0.0
    %170 = vmatpush1.msra.mxu0 0.0
    %171 = vmatprep.mubr.f32.mxu0 0.0
    %172 = vmatmul.mubr.f32.gmra.mrb[0].mxu0 %v102
    %v173 = vpop.f32.mrb[0].mxu0
    %v174 = vadd.f32 0.0, %v173
    %v175 = vpop.f32.mrb[0].mxu0
    %176 = vmatprep.mubr.f32.mxu0 0.0
    %177 = vmatmul.mubr.f32.gmra.mrb[0].mxu0 %v105
    %v178 = vpop.f32.mrb[0].mxu0
    %v179 = vadd.f32 0.0, %v178
    %v180 = vpop.f32.mrb[0].mxu0
    %181 = vdwg.mxu0
    %183 = vset.pattern.permute.xlu0 0
    %184 = vperm.xlu0 %183, %v83
    %v185 = vpop.permute.xlu0 %184
    %v187 = vadd.f32 %v174, %v185
    %188 = vset.pattern.permute.xlu0 1
    %189 = vperm.xlu0 %188, %v83
    %v190 = vpop.permute.xlu0 %189
    %v192 = vadd.f32 %v179, %v190
    %v193 = vmul.f32 %v187, %v187
    %194 = vmatprep.subr.mxu0 0.0
    %195 = vmatpush1.xpose.msra.mxu0 %v78
    %196 = vmatprep.subr.mxu0 0.0
    %197 = vmatpush1.xpose.msra.mxu0 0.0
    %198 = vmatprep.subr.mxu0 0.0
    %199 = vmatpush1.xpose.msra.mxu0 0.0
    %200 = vmatprep.subr.mxu0 0.0
    %201 = vmatpush1.xpose.msra.mxu0 0.0
    %202 = vmatprep.subr.mxu0 0.0
    %203 = vmatpush1.xpose.msra.mxu0 0.0
    %204 = vmatprep.subr.mxu0 0.0
    %205 = vmatpush1.xpose.msra.mxu0 0.0
    %206 = vmatprep.subr.mxu0 0.0
    %207 = vmatpush1.xpose.msra.mxu0 0.0
    %208 = vmatprep.subr.mxu0 0.0
    %209 = vmatpush1.xpose.msra.mxu0 0.0
    %210 = vmatprep.subr.mxu0 0.0
    %211 = vmatpush1.xpose.msra.mxu0 0.0
    %212 = vmatprep.subr.mxu0 0.0
    %213 = vmatpush1.xpose.msra.mxu0 0.0
    %214 = vmatprep.subr.mxu0 0.0
    %215 = vmatpush1.xpose.msra.mxu0 0.0
    %216 = vmatprep.subr.mxu0 0.0
    %217 = vmatpush1.xpose.msra.mxu0 0.0
    %218 = vmatprep.subr.mxu0 0.0
    %219 = vmatpush1.xpose.msra.mxu0 0.0
    %220 = vmatprep.subr.mxu0 0.0
    %221 = vmatpush1.xpose.msra.mxu0 0.0
    %222 = vmatprep.subr.mxu0 0.0
    %223 = vmatpush1.xpose.msra.mxu0 0.0
    %224 = vmatprep.subr.mxu0 0.0
    %225 = vmatpush1.xpose.msra.mxu0 0.0
    %226 = vmatprep.subr.mxu0 0.0
    %227 = vmatpush1.xpose.msra.mxu0 0.0
    %228 = vmatprep.subr.mxu0 0.0
    %229 = vmatpush1.xpose.msra.mxu0 0.0
    %230 = vmatprep.subr.mxu0 0.0
    %231 = vmatpush1.xpose.msra.mxu0 0.0
    %232 = vmatprep.subr.mxu0 0.0
    %233 = vmatpush1.xpose.msra.mxu0 0.0
    %234 = vmatprep.subr.mxu0 0.0
    %235 = vmatpush1.xpose.msra.mxu0 0.0
    %236 = vmatprep.subr.mxu0 0.0
    %237 = vmatpush1.xpose.msra.mxu0 0.0
    %238 = vmatprep.subr.mxu0 0.0
    %239 = vmatpush1.xpose.msra.mxu0 0.0
    %240 = vmatprep.subr.mxu0 0.0
    %241 = vmatpush1.xpose.msra.mxu0 0.0
    %242 = vmatprep.subr.mxu0 0.0
    %243 = vmatpush1.xpose.msra.mxu0 0.0
    %244 = vmatprep.subr.mxu0 0.0
    %245 = vmatpush1.xpose.msra.mxu0 0.0
    %246 = vmatprep.subr.mxu0 0.0
    %247 = vmatpush1.xpose.msra.mxu0 0.0
    %248 = vmatprep.subr.mxu0 0.0
    %249 = vmatpush1.xpose.msra.mxu0 0.0
    %250 = vmatprep.subr.mxu0 0.0
    %251 = vmatpush1.xpose.msra.mxu0 0.0
    %252 = vmatprep.subr.mxu0 0.0
    %253 = vmatpush1.xpose.msra.mxu0 0.0
    %254 = vmatprep.subr.mxu0 0.0
    %255 = vmatpush1.xpose.msra.mxu0 0.0
    %256 = vmatprep.subr.mxu0 0.0
    %257 = vmatpush1.xpose.msra.mxu0 0.0
    %258 = vmatprep.mubr.f32.mxu0 0.0
    %259 = vmatmul.mubr.f32.gmra.mrb[0].mxu0 %v187
    %v260 = vpop.f32.mrb[0].mxu0
    %v261 = vadd.f32 0.0, %v260
    %v262 = vpop.f32.mrb[0].mxu0
    %263 = vmatprep.mubr.f32.mxu0 0.0
    %264 = vmatmul.mubr.f32.gmra.mrb[0].mxu0 %v193
    %v265 = vpop.f32.mrb[0].mxu0
    %v266 = vadd.f32 0.0, %v265
    %v267 = vpop.f32.mrb[0].mxu0
    %268 = vdwg.mxu0
    %vm269 = vcmask 130048
    %v271 = vsel %vm269, %v79, 0
    %v274 = vsel %vm269, %v80, 0
    %276 = vmatprep.subr.mxu0 0.0
    %277 = vmatpush1.msra.mxu0 %v261
    %278 = vmatprep.subr.mxu0 0.0
    %279 = vmatpush1.msra.mxu0 %v266
    %280 = vmatprep.subr.mxu0 0.0
    %281 = vmatpush1.msra.mxu0 0.0
    %282 = vmatprep.subr.mxu0 0.0
    %283 = vmatpush1.msra.mxu0 0.0
    %284 = vmatprep.subr.mxu0 0.0
    %285 = vmatpush1.msra.mxu0 0.0
    %286 = vmatprep.subr.mxu0 0.0
    %287 = vmatpush1.msra.mxu0 0.0
    %288 = vmatprep.subr.mxu0 0.0
    %289 = vmatpush1.msra.mxu0 0.0
    %290 = vmatprep.subr.mxu0 0.0
    %291 = vmatpush1.msra.mxu0 0.0
    %292 = vmatprep.subr.mxu0 0.0
    %293 = vmatpush1.msra.mxu0 0.0
    %294 = vmatprep.subr.mxu0 0.0
    %295 = vmatpush1.msra.mxu0 0.0
    %296 = vmatprep.subr.mxu0 0.0
    %297 = vmatpush1.msra.mxu0 0.0
    %298 = vmatprep.subr.mxu0 0.0
    %299 = vmatpush1.msra.mxu0 0.0
    %300 = vmatprep.subr.mxu0 0.0
    %301 = vmatpush1.msra.mxu0 0.0
    %302 = vmatprep.subr.mxu0 0.0
    %303 = vmatpush1.msra.mxu0 0.0
    %304 = vmatprep.subr.mxu0 0.0
    %305 = vmatpush1.msra.mxu0 0.0
    %306 = vmatprep.subr.mxu0 0.0
    %307 = vmatpush1.msra.mxu0 0.0
    %308 = vmatprep.subr.mxu0 0.0
    %309 = vmatpush1.msra.mxu0 0.0
    %310 = vmatprep.subr.mxu0 0.0
    %311 = vmatpush1.msra.mxu0 0.0
    %312 = vmatprep.subr.mxu0 0.0
    %313 = vmatpush1.msra.mxu0 0.0
    %314 = vmatprep.subr.mxu0 0.0
    %315 = vmatpush1.msra.mxu0 0.0
    %316 = vmatprep.subr.mxu0 0.0
    %317 = vmatpush1.msra.mxu0 0.0
    %318 = vmatprep.subr.mxu0 0.0
    %319 = vmatpush1.msra.mxu0 0.0
    %320 = vmatprep.subr.mxu0 0.0
    %321 = vmatpush1.msra.mxu0 0.0
    %322 = vmatprep.subr.mxu0 0.0
    %323 = vmatpush1.msra.mxu0 0.0
    %324 = vmatprep.subr.mxu0 0.0
    %325 = vmatpush1.msra.mxu0 0.0
    %326 = vmatprep.subr.mxu0 0.0
    %327 = vmatpush1.msra.mxu0 0.0
    %328 = vmatprep.subr.mxu0 0.0
    %329 = vmatpush1.msra.mxu0 0.0
    %330 = vmatprep.subr.mxu0 0.0
    %331 = vmatpush1.msra.mxu0 0.0
    %332 = vmatprep.subr.mxu0 0.0
    %333 = vmatpush1.msra.mxu0 0.0
    %334 = vmatprep.subr.mxu0 0.0
    %335 = vmatpush1.msra.mxu0 0.0
    %336 = vmatprep.subr.mxu0 0.0
    %337 = vmatpush1.msra.mxu0 0.0
    %338 = vmatprep.subr.mxu0 0.0
    %339 = vmatpush1.msra.mxu0 0.0
    %340 = vmatprep.mubr.f32.mxu0 0.0
    %341 = vmatmul.mubr.f32.gmra.mrb[0].mxu0 %v271
    %v342 = vpop.f32.mrb[0].mxu0
    %v343 = vadd.f32 0.0, %v342
    %v344 = vpop.f32.mrb[0].mxu0
    %345 = vmatprep.mubr.f32.mxu0 0.0
    %346 = vmatmul.mubr.f32.gmra.mrb[0].mxu0 %v274
    %v347 = vpop.f32.mrb[0].mxu0
    %v348 = vadd.f32 0.0, %v347
    %v349 = vpop.f32.mrb[0].mxu0
    %350 = vdwg.mxu0
    %v351 = vmul.f32 %v343, %v343
    %v352 = vsub.f32 %v348, %v351
    %v353 = vadd.f32 %v352, 1e-05
    %v354 = vrsqrt.pop %v353
    %355 = vset.pattern.permute.xlu0 2
    %356 = vperm.xlu0 %355, %v83
    %v357 = vpop.permute.xlu0 %356
    %v359 = vmul.f32 %v357, %v354
    %v360 = vmul.f32 %v343, %v359
    %361 = vset.pattern.permute.xlu0 3
    %362 = vperm.xlu0 %361, %v83
    %v363 = vpop.permute.xlu0 %362
    %v365 = vsub.f32 %v363, %v360
    %vm366 = vcmask 15360
    %v368 = vsel %vm366, %v359, 0
    %v371 = vsel %vm366, %v365, 0
    %vm373 = vcmask 1041408
    %v375 = vsel %vm373, %v78, 0
    %377 = vmatprep.subr.mxu0 0.0
    %378 = vmatpush1.msra.mxu0 %v375
    %379 = vmatprep.subr.mxu0 0.0
    %380 = vmatpush1.msra.mxu0 0.0
    %381 = vmatprep.subr.mxu0 0.0
    %382 = vmatpush1.msra.mxu0 0.0
    %383 = vmatprep.subr.mxu0 0.0
    %384 = vmatpush1.msra.mxu0 0.0
    %385 = vmatprep.subr.mxu0 0.0
    %386 = vmatpush1.msra.mxu0 0.0
    %387 = vmatprep.subr.mxu0 0.0
    %388 = vmatpush1.msra.mxu0 0.0
    %389 = vmatprep.subr.mxu0 0.0
    %390 = vmatpush1.msra.mxu0 0.0
    %391 = vmatprep.subr.mxu0 0.0
    %392 = vmatpush1.msra.mxu0 0.0
    %393 = vmatprep.subr.mxu0 0.0
    %394 = vmatpush1.msra.mxu0 0.0
    %395 = vmatprep.subr.mxu0 0.0
    %396 = vmatpush1.msra.mxu0 0.0
    %397 = vmatprep.subr.mxu0 0.0
    %398 = vmatpush1.msra.mxu0 0.0
    %399 = vmatprep.subr.mxu0 0.0
    %400 = vmatpush1.msra.mxu0 0.0
    %401 = vmatprep.subr.mxu0 0.0
    %402 = vmatpush1.msra.mxu0 0.0
    %403 = vmatprep.subr.mxu0 0.0
    %404 = vmatpush1.msra.mxu0 0.0
    %405 = vmatprep.subr.mxu0 0.0
    %406 = vmatpush1.msra.mxu0 0.0
    %407 = vmatprep.subr.mxu0 0.0
    %408 = vmatpush1.msra.mxu0 0.0
    %409 = vmatprep.subr.mxu0 0.0
    %410 = vmatpush1.msra.mxu0 0.0
    %411 = vmatprep.subr.mxu0 0.0
    %412 = vmatpush1.msra.mxu0 0.0
    %413 = vmatprep.subr.mxu0 0.0
    %414 = vmatpush1.msra.mxu0 0.0
    %415 = vmatprep.subr.mxu0 0.0
    %416 = vmatpush1.msra.mxu0 0.0
    %417 = vmatprep.subr.mxu0 0.0
    %418 = vmatpush1.msra.mxu0 0.0
    %419 = vmatprep.subr.mxu0 0.0
    %420 = vmatpush1.msra.mxu0 0.0
    %421 = vmatprep.subr.mxu0 0.0
    %422 = vmatpush1.msra.mxu0 0.0
    %423 = vmatprep.subr.mxu0 0.0
    %424 = vmatpush1.msra.mxu0 0.0
    %425 = vmatprep.subr.mxu0 0.0
    %426 = vmatpush1.msra.mxu0 0.0
    %427 = vmatprep.subr.mxu0 0.0
    %428 = vmatpush1.msra.mxu0 0.0
    %429 = vmatprep.subr.mxu0 0.0
    %430 = vmatpush1.msra.mxu0 0.0
    %431 = vmatprep.subr.mxu0 0.0
    %432 = vmatpush1.msra.mxu0 0.0
    %433 = vmatprep.subr.mxu0 0.0
    %434 = vmatpush1.msra.mxu0 0.0
    %435 = vmatprep.subr.mxu0 0.0
    %436 = vmatpush1.msra.mxu0 0.0
    %437 = vmatprep.subr.mxu0 0.0
    %438 = vmatpush1.msra.mxu0 0.0
    %439 = vmatprep.subr.mxu0 0.0
    %440 = vmatpush1.msra.mxu0 0.0
    %441 = vmatprep.mubr.f32.mxu0 0.0
    %442 = vmatmul.mubr.f32.gmra.mrb[0].mxu0 %v368
    %v443 = vpop.f32.mrb[0].mxu0
    %v444 = vadd.f32 0.0, %v443
    %v445 = vpop.f32.mrb[0].mxu0
    %446 = vmatprep.mubr.f32.mxu0 0.0
    %447 = vmatmul.mubr.f32.gmra.mrb[0].mxu0 %v371
    %v448 = vpop.f32.mrb[0].mxu0
    %v449 = vadd.f32 0.0, %v448
    %v450 = vpop.f32.mrb[0].mxu0
    %451 = vdwg.mxu0
    %v452 = vmul.f32 %v187, %v444
    %v453 = vadd.f32 %v452, %v449
    %v454 = vmul.f32 %v453, 0.5
    %v455 = vtanh.pop %v454
    %v456 = vadd.f32 %v455, 1.0
    %v457 = vmul.f32 %v456, 0.5
    %v458 = vmul.f32 %v453, %v457
    %459 = vrot.lane.b32.xlu0 %v458, 1
    %v460 = vpop.permute.xlu0 %459
    %v461 = vmul.f32 %v460, %v89
    %462 = vrot.lane.b32.xlu0 %v458, 127
    %v463 = vpop.permute.xlu0 %462
    %v464 = vmul.f32 %v463, %v96
    %v465 = vld [vmem:[#allocation5] sm:$0xff]
    %466 = vset.pattern.permute.xlu0 4
    %467 = vperm.xlu0 %466, %v83
    %v468 = vpop.permute.xlu0 %467
    %v471 = vsel %vm100, %v465, 0
    %473 = vmatprep.subr.mxu0 0.0
    %474 = vmatpush1.msra.mxu0 %v461
    %475 = vmatprep.subr.mxu0 0.0
    %476 = vmatpush1.msra.mxu0 %v458
    %477 = vmatprep.subr.mxu0 0.0
    %478 = vmatpush1.msra.mxu0 %v464
    %479 = vmatprep.subr.mxu0 0.0
    %480 = vmatpush1.msra.mxu0 0.0
    %481 = vmatprep.subr.mxu0 0.0
    %482 = vmatpush1.msra.mxu0 0.0
    %483 = vmatprep.subr.mxu0 0.0
    %484 = vmatpush1.msra.mxu0 0.0
    %485 = vmatprep.subr.mxu0 0.0
    %486 = vmatpush1.msra.mxu0 0.0
    %487 = vmatprep.subr.mxu0 0.0
    %488 = vmatpush1.msra.mxu0 0.0
    %489 = vmatprep.subr.mxu0 0.0
    %490 = vmatpush1.msra.mxu0 0.0
    %491 = vmatprep.subr.mxu0 0.0
    %492 = vmatpush1.msra.mxu0 0.0
    %493 = vmatprep.subr.mxu0 0.0
    %494 = vmatpush1.msra.mxu0 0.0
    %495 = vmatprep.subr.mxu0 0.0
    %496 = vmatpush1.msra.mxu0 0.0
    %497 = vmatprep.subr.mxu0 0.0
    %498 = vmatpush1.msra.mxu0 0.0
    %499 = vmatprep.subr.mxu0 0.0
    %500 = vmatpush1.msra.mxu0 0.0
    %501 = vmatprep.subr.mxu0 0.0
    %502 = vmatpush1.msra.mxu0 0.0
    %503 = vmatprep.subr.mxu0 0.0
    %504 = vmatpush1.msra.mxu0 0.0
    %505 = vmatprep.subr.mxu0 0.0
    %506 = vmatpush1.msra.mxu0 0.0
    %507 = vmatprep.subr.mxu0 0.0
    %508 = vmatpush1.msra.mxu0 0.0
    %509 = vmatprep.subr.mxu0 0.0
    %510 = vmatpush1.msra.mxu0 0.0
    %511 = vmatprep.subr.mxu0 0.0
    %512 = vmatpush1.msra.mxu0 0.0
    %513 = vmatprep.subr.mxu0 0.0
    %514 = vmatpush1.msra.mxu0 0.0
    %515 = vmatprep.subr.mxu0 0.0
    %516 = vmatpush1.msra.mxu0 0.0
    %517 = vmatprep.subr.mxu0 0.0
    %518 = vmatpush1.msra.mxu0 0.0
    %519 = vmatprep.subr.mxu0 0.0
    %520 = vmatpush1.msra.mxu0 0.0
    %521 = vmatprep.subr.mxu0 0.0
    %522 = vmatpush1.msra.mxu0 0.0
    %523 = vmatprep.subr.mxu0 0.0
    %524 = vmatpush1.msra.mxu0 0.0
    %525 = vmatprep.subr.mxu0 0.0
    %526 = vmatpush1.msra.mxu0 0.0
    %527 = vmatprep.subr.mxu0 0.0
    %528 = vmatpush1.msra.mxu0 0.0
    %529 = vmatprep.subr.mxu0 0.0
    %530 = vmatpush1.msra.mxu0 0.0
    %531 = vmatprep.subr.mxu0 0.0
    %532 = vmatpush1.msra.mxu0 0.0
    %533 = vmatprep.subr.mxu0 0.0
    %534 = vmatpush1.msra.mxu0 0.0
    %535 = vmatprep.subr.mxu0 0.0
    %536 = vmatpush1.msra.mxu0 0.0
    %537 = vmatprep.mubr.f32.mxu0 0.0
    %538 = vmatmul.mubr.f32.gmra.mrb[0].mxu0 %v471
    %v539 = vpop.f32.mrb[0].mxu0
    %v540 = vadd.f32 %v468, %v539
    %v541 = vpop.f32.mrb[0].mxu0
    %542 = vdwg.mxu0
    %v543 = vmul.f32 %v540, %v540
    %544 = vmatprep.subr.mxu0 0.0
    %545 = vmatpush1.xpose.msra.mxu0 %v78
    %546 = vmatprep.subr.mxu0 0.0
    %547 = vmatpush1.xpose.msra.mxu0 0.0
    %548 = vmatprep.subr.mxu0 0.0
    %549 = vmatpush1.xpose.msra.mxu0 0.0
    %550 = vmatprep.subr.mxu0 0.0
    %551 = vmatpush1.xpose.msra.mxu0 0.0
    %552 = vmatprep.subr.mxu0 0.0
    %553 = vmatpush1.xpose.msra.mxu0 0.0
    %554 = vmatprep.subr.mxu0 0.0
    %555 = vmatpush1.xpose.msra.mxu0 0.0
    %556 = vmatprep.subr.mxu0 0.0
    %557 = vmatpush1.xpose.msra.mxu0 0.0
    %558 = vmatprep.subr.mxu0 0.0
    %559 = vmatpush1.xpose.msra.mxu0 0.0
    %560 = vmatprep.subr.mxu0 0.0
    %561 = vmatpush1.xpose.msra.mxu0 0.0
    %562 = vmatprep.subr.mxu0 0.0
    %563 = vmatpush1.xpose.msra.mxu0 0.0
    %564 = vmatprep.subr.mxu0 0.0
    %565 = vmatpush1.xpose.msra.mxu0 0.0
    %566 = vmatprep.subr.mxu0 0.0
    %567 = vmatpush1.xpose.msra.mxu0 0.0
    %568 = vmatprep.subr.mxu0 0.0
    %569 = vmatpush1.xpose.msra.mxu0 0.0
    %570 = vmatprep.subr.mxu0 0.0
    %571 = vmatpush1.xpose.msra.mxu0 0.0
    %572 = vmatprep.subr.mxu0 0.0
    %573 = vmatpush1.xpose.msra.mxu0 0.0
    %574 = vmatprep.subr.mxu0 0.0
    %575 = vmatpush1.xpose.msra.mxu0 0.0
    %576 = vmatprep.subr.mxu0 0.0
    %577 = vmatpush1.xpose.msra.mxu0 0.0
    %578 = vmatprep.subr.mxu0 0.0
    %579 = vmatpush1.xpose.msra.mxu0 0.0
    %580 = vmatprep.subr.mxu0 0.0
    %581 = vmatpush1.xpose.msra.mxu0 0.0
    %582 = vmatprep.subr.mxu0 0.0
    %583 = vmatpush1.xpose.msra.mxu0 0.0
    %584 = vmatprep.subr.mxu0 0.0
    %585 = vmatpush1.xpose.msra.mxu0 0.0
    %586 = vmatprep.subr.mxu0 0.0
    %587 = vmatpush1.xpose.msra.mxu0 0.0
    %588 = vmatprep.subr.mxu0 0.0
    %589 = vmatpush1.xpose.msra.mxu0 0.0
    %590 = vmatprep.subr.mxu0 0.0
    %591 = vmatpush1.xpose.msra.mxu0 0.0
    %592 = vmatprep.subr.mxu0 0.0
    %593 = vmatpush1.xpose.msra.mxu0 0.0
    %594 = vmatprep.subr.mxu0 0.0
    %595 = vmatpush1.xpose.msra.mxu0 0.0
    %596 = vmatprep.subr.mxu0 0.0
    %597 = vmatpush1.xpose.msra.mxu0 0.0
    %598 = vmatprep.subr.mxu0 0.0
    %599 = vmatpush1.xpose.msra.mxu0 0.0
    %600 = vmatprep.subr.mxu0 0.0
    %601 = vmatpush1.xpose.msra.mxu0 0.0
    %602 = vmatprep.subr.mxu0 0.0
    %603 = vmatpush1.xpose.msra.mxu0 0.0
    %604 = vmatprep.subr.mxu0 0.0
    %605 = vmatpush1.xpose.msra.mxu0 0.0
    %606 = vmatprep.subr.mxu0 0.0
    %607 = vmatpush1.xpose.msra.mxu0 0.0
    %608 = vmatprep.mubr.f32.mxu0 0.0
    %609 = vmatmul.mubr.f32.gmra.mrb[0].mxu0 %v540
    %v610 = vpop.f32.mrb[0].mxu0
    %v611 = vadd.f32 0.0, %v610
    %v612 = vpop.f32.mrb[0].mxu0
    %613 = vmatprep.mubr.f32.mxu0 0.0
    %614 = vmatmul.mubr.f32.gmra.mrb[0].mxu0 %v543
    %v615 = vpop.f32.mrb[0].mxu0
    %v616 = vadd.f32 0.0, %v615
    %v617 = vpop.f32.mrb[0].mxu0
    %618 = vdwg.mxu0
    %619 = vmatprep.subr.mxu0 0.0
    %620 = vmatpush1.msra.mxu0 %v611
    %621 = vmatprep.subr.mxu0 0.0
    %622 = vmatpush1.msra.mxu0 %v616
    %623 = vmatprep.subr.mxu0 0.0
    %624 = vmatpush1.msra.mxu0 0.0
    %625 = vmatprep.subr.mxu0 0.0
    %626 = vmatpush1.msra.mxu0 0.0
    %627 = vmatprep.subr.mxu0 0.0
    %628 = vmatpush1.msra.mxu0 0.0
    %629 = vmatprep.subr.mxu0 0.0
    %630 = vmatpush1.msra.mxu0 0.0
    %631 = vmatprep.subr.mxu0 0.0
    %632 = vmatpush1.msra.mxu0 0.0
    %633 = vmatprep.subr.mxu0 0.0
    %634 = vmatpush1.msra.mxu0 0.0
    %635 = vmatprep.subr.mxu0 0.0
    %636 = vmatpush1.msra.mxu0 0.0
    %637 = vmatprep.subr.mxu0 0.0
    %638 = vmatpush1.msra.mxu0 0.0
    %639 = vmatprep.subr.mxu0 0.0
    %640 = vmatpush1.msra.mxu0 0.0
    %641 = vmatprep.subr.mxu0 0.0
    %642 = vmatpush1.msra.mxu0 0.0
    %643 = vmatprep.subr.mxu0 0.0
    %644 = vmatpush1.msra.mxu0 0.0
    %645 = vmatprep.subr.mxu0 0.0
    %646 = vmatpush1.msra.mxu0 0.0
    %647 = vmatprep.subr.mxu0 0.0
    %648 = vmatpush1.msra.mxu0 0.0
    %649 = vmatprep.subr.mxu0 0.0
    %650 = vmatpush1.msra.mxu0 0.0
    %651 = vmatprep.subr.mxu0 0.0
    %652 = vmatpush1.msra.mxu0 0.0
    %653 = vmatprep.subr.mxu0 0.0
    %654 = vmatpush1.msra.mxu0 0.0
    %655 = vmatprep.subr.mxu0 0.0
    %656 = vmatpush1.msra.mxu0 0.0
    %657 = vmatprep.subr.mxu0 0.0
    %658 = vmatpush1.msra.mxu0 0.0
    %659 = vmatprep.subr.mxu0 0.0
    %660 = vmatpush1.msra.mxu0 0.0
    %661 = vmatprep.subr.mxu0 0.0
    %662 = vmatpush1.msra.mxu0 0.0
    %663 = vmatprep.subr.mxu0 0.0
    %664 = vmatpush1.msra.mxu0 0.0
    %665 = vmatprep.subr.mxu0 0.0
    %666 = vmatpush1.msra.mxu0 0.0
    %667 = vmatprep.subr.mxu0 0.0
    %668 = vmatpush1.msra.mxu0 0.0
    %669 = vmatprep.subr.mxu0 0.0
    %670 = vmatpush1.msra.mxu0 0.0
    %671 = vmatprep.subr.mxu0 0.0
    %672 = vmatpush1.msra.mxu0 0.0
    %673 = vmatprep.subr.mxu0 0.0
    %674 = vmatpush1.msra.mxu0 0.0
    %675 = vmatprep.subr.mxu0 0.0
    %676 = vmatpush1.msra.mxu0 0.0
    %677 = vmatprep.subr.mxu0 0.0
    %678 = vmatpush1.msra.mxu0 0.0
    %679 = vmatprep.subr.mxu0 0.0
    %680 = vmatpush1.msra.mxu0 0.0
    %681 = vmatprep.subr.mxu0 0.0
    %682 = vmatpush1.msra.mxu0 0.0
    %683 = vmatprep.mubr.f32.mxu0 0.0
    %684 = vmatmul.mubr.f32.gmra.mrb[0].mxu0 %v271
    %v685 = vpop.f32.mrb[0].mxu0
    %v686 = vadd.f32 0.0, %v685
    %v687 = vpop.f32.mrb[0].mxu0
    %688 = vmatprep.mubr.f32.mxu0 0.0
    %689 = vmatmul.mubr.f32.gmra.mrb[0].mxu0 %v274
    %v690 = vpop.f32.mrb[0].mxu0
    %v691 = vadd.f32 0.0, %v690
    %v692 = vpop.f32.mrb[0].mxu0
    %693 = vdwg.mxu0
    %v694 = vmul.f32 %v686, %v686
    %v695 = vsub.f32 %v691, %v694
    %v696 = vadd.f32 %v695, 1e-05
    %v697 = vrsqrt.pop %v696
    %698 = vset.pattern.permute.xlu0 5
    %699 = vperm.xlu0 %698, %v83
    %v700 = vpop.permute.xlu0 %699
    %v702 = vmul.f32 %v700, %v697
    %v703 = vmul.f32 %v686, %v702
    %704 = vset.pattern.permute.xlu0 6
    %705 = vperm.xlu0 %704, %v83
    %v706 = vpop.permute.xlu0 %705
    %v708 = vsub.f32 %v706, %v703
    %v709 = vld [vmem:[%s1] sm:$0xff]
    %v710 = vadd.f32 %v708, %v709
    %v712 = vsel %vm366, %v702, 0
    %v715 = vsel %vm366, %v710, 0
    %717 = vmatprep.subr.mxu0 0.0
    %718 = vmatpush1.msra.mxu0 %v375
    %719 = vmatprep.subr.mxu0 0.0
    %720 = vmatpush1.msra.mxu0 0.0
    %721 = vmatprep.subr.mxu0 0.0
    %722 = vmatpush1.msra.mxu0 0.0
    %723 = vmatprep.subr.mxu0 0.0
    %724 = vmatpush1.msra.mxu0 0.0
    %725 = vmatprep.subr.mxu0 0.0
    %726 = vmatpush1.msra.mxu0 0.0
    %727 = vmatprep.subr.mxu0 0.0
    %728 = vmatpush1.msra.mxu0 0.0
    %729 = vmatprep.subr.mxu0 0.0
    %730 = vmatpush1.msra.mxu0 0.0
    %731 = vmatprep.subr.mxu0 0.0
    %732 = vmatpush1.msra.mxu0 0.0
    %733 = vmatprep.subr.mxu0 0.0
    %734 = vmatpush1.msra.mxu0 0.0
    %735 = vmatprep.subr.mxu0 0.0
    %736 = vmatpush1.msra.mxu0 0.0
    %737 = vmatprep.subr.mxu0 0.0
    %738 = vmatpush1.msra.mxu0 0.0
    %739 = vmatprep.subr.mxu0 0.0
    %740 = vmatpush1.msra.mxu0 0.0
    %741 = vmatprep.subr.mxu0 0.0
    %742 = vmatpush1.msra.mxu0 0.0
    %743 = vmatprep.subr.mxu0 0.0
    %744 = vmatpush1.msra.mxu0 0.0
    %745 = vmatprep.subr.mxu0 0.0
    %746 = vmatpush1.msra.mxu0 0.0
    %747 = vmatprep.subr.mxu0 0.0
    %748 = vmatpush1.msra.mxu0 0.0
    %749 = vmatprep.subr.mxu0 0.0
    %750 = vmatpush1.msra.mxu0 0.0
    %751 = vmatprep.subr.mxu0 0.0
    %752 = vmatpush1.msra.mxu0 0.0
    %753 = vmatprep.subr.mxu0 0.0
    %754 = vmatpush1.msra.mxu0 0.0
    %755 = vmatprep.subr.mxu0 0.0
    %756 = vmatpush1.msra.mxu0 0.0
    %757 = vmatprep.subr.mxu0 0.0
    %758 = vmatpush1.msra.mxu0 0.0
    %759 = vmatprep.subr.mxu0 0.0
    %760 = vmatpush1.msra.mxu0 0.0
    %761 = vmatprep.subr.mxu0 0.0
    %762 = vmatpush1.msra.mxu0 0.0
    %763 = vmatprep.subr.mxu0 0.0
    %764 = vmatpush1.msra.mxu0 0.0
    %765 = vmatprep.subr.mxu0 0.0
    %766 = vmatpush1.msra.mxu0 0.0
    %767 = vmatprep.subr.mxu0 0.0
    %768 = vmatpush1.msra.mxu0 0.0
    %769 = vmatprep.subr.mxu0 0.0
    %770 = vmatpush1.msra.mxu0 0.0
    %771 = vmatprep.subr.mxu0 0.0
    %772 = vmatpush1.msra.mxu0 0.0
    %773 = vmatprep.subr.mxu0 0.0
    %774 = vmatpush1.msra.mxu0 0.0
    %775 = vmatprep.subr.mxu0 0.0
    %776 = vmatpush1.msra.mxu0 0.0
    %777 = vmatprep.subr.mxu0 0.0
    %778 = vmatpush1.msra.mxu0 0.0
    %779 = vmatprep.subr.mxu0 0.0
    %780 = vmatpush1.msra.mxu0 0.0
    %781 = vmatprep.mubr.f32.mxu0 0.0
    %782 = vmatmul.mubr.f32.gmra.mrb[0].mxu0 %v712
    %v783 = vpop.f32.mrb[0].mxu0
    %v784 = vadd.f32 0.0, %v783
    %v785 = vpop.f32.mrb[0].mxu0
    %786 = vmatprep.mubr.f32.mxu0 0.0
    %787 = vmatmul.mubr.f32.gmra.mrb[0].mxu0 %v715
    %v788 = vpop.f32.mrb[0].mxu0
    %v789 = vadd.f32 0.0, %v788
    %v790 = vpop.f32.mrb[0].mxu0
    %791 = vdwg.mxu0
    %v792 = vmul.f32 %v540, %v784
    %v793 = vadd.f32 %v792, %v789
    %v794 = vadd.f32 %v793, %v192
    %v795 = vmul.f32 %v794, 0.5
    %v796 = vtanh.pop %v795
    %v797 = vadd.f32 %v796, 1.0
    %v798 = vmul.f32 %v797, 0.5
    %v799 = vmul.f32 %v794, %v798
    %800 = vst [vmem:[#allocation10] sm:$0xff] %v799
    // Predicated region
    $region50: #{tpu_custom_call.1} parent=1 // pred_check
      _
    $region51: #{tpu_custom_call.1} parent=1 // pred_check_branch
      %802 = sbr.rel (0) target = $region53
    $region52: #{tpu_custom_call.1} parent=1 // pred_region
      %s804 = ssub.s32 128, 128
      %805 = vsyncadd [#allocation4], %s804
      %s807 = sshll.u32 [#allocation10], 4
      %s808 = int_to_ptr.vmem [resolvable:$true] %s807
      %810 = dma.vmem_to_hbm [thread:$0]  %s808, 128, %s8, [#allocation4]
    $region53: #{tpu_custom_call.1} parent=1 // pred_fallthru
      _
    // Predicated region
    $region54: #{tpu_custom_call.1} parent=1 // pred_check
      _
    $region55: #{tpu_custom_call.1} parent=1 // pred_check_branch
      %812 = sbr.rel (0) target = $region57
    $region56: #{tpu_custom_call.1} parent=1 // pred_region
      %813 = dma.done [#allocation4], 128
    $region57: #{tpu_custom_call.1} parent=1 // pred_fallthru
      _
    %814 = vsyncpa [#allocation3], 1
    %815 = vsyncpa [#allocation6], 1
    %816 = vsyncpa [#allocation9], 1
    %817 = vsyncpa [#allocation4], 1

</llo_original>
